<compile_context>
chip_gen: v5e
topology: v5e:2x2
jax: 0.10.0
libtpu: 0.0.40
codegen_flags: <defaults>
</compile_context>

<pallas_src>
import functools

import jax
import jax.numpy as jnp
from jax.experimental import pallas as pl
from jax.experimental.pallas import tpu as pltpu

LANE = 128


def _round_up(n, m):
    return ((n + m - 1) // m) * m


def _full(shape):
    # whole-array block, single grid step
    return pl.BlockSpec(shape, lambda i: (0, 0))


# ---------------------------------------------------------------------------
# Kernel 1: fused addnode/addedge head
#   logits = h_G @ [W_addnode || W_addedge || 0-pad] + [b_an || b_ae || 0-pad]
#   out[:, 0:d_an]        = log_softmax(logits[:, 0:d_an])
#   out[:, d_an:d_an+d_ae]= log_softmax(logits[:, d_an:d_an+d_ae])
# Output is a lane-dense (B, 128·k) slab; padded / cross-segment lanes are
# masked with a large negative before max/logsumexp so normalization matches
# the un-padded computation exactly.
# ---------------------------------------------------------------------------
def fused_logits_kernel(x_ref, w_ref, b_ref, o_ref, *, d_an, d_ae):
    logits = jnp.dot(x_ref[...], w_ref[...],
                     preferred_element_type=jnp.float32) + b_ref[...]
    bsz, dpad = logits.shape
    lane = jax.lax.broadcasted_iota(jnp.int32, (bsz, dpad), 1)
    neg = jnp.float32(-1e30)

    def seg_log_softmax(lo, hi):
        in_seg = jnp.logical_and(lane >= lo, lane < hi)
        masked = jnp.where(in_seg, logits, neg)
        m = jnp.max(masked, axis=-1, keepdims=True)
        z = masked - m
        p = jnp.where(in_seg, jnp.exp(z), 0.0)
        lse = jnp.log(jnp.sum(p, axis=-1, keepdims=True))
        return in_seg, z - lse

    m0, lp0 = seg_log_softmax(0, d_an)
    m1, lp1 = seg_log_softmax(d_an, d_an + d_ae)
    o_ref[...] = jnp.where(m0, lp0, jnp.where(m1, lp1, 0.0)).astype(o_ref.dtype)


def fused_addnode_addedge_logits(h_G, w_cat, b_cat, d_an, d_ae):
    B, Din = h_G.shape
    Dpad = w_cat.shape[1]
    kernel = functools.partial(fused_logits_kernel, d_an=d_an, d_ae=d_ae)
    flops = 2 * B * Din * Dpad + 10 * B * Dpad
    bytes_accessed = 4 * (B * Din + Din * Dpad + Dpad + B * Dpad)
    out = pl.pallas_call(
        kernel,
        out_shape=jax.ShapeDtypeStruct((B, Dpad), jnp.float32),
        grid=(1,),
        in_specs=[_full((B, Din)), _full((Din, Dpad)), _full((1, Dpad))],
        out_specs=_full((B, Dpad)),
        compiler_params=pltpu.CompilerParams(
            dimension_semantics=("arbitrary",)),
        cost_estimate=pl.CostEstimate(flops=flops,
                                      transcendentals=2 * B * Dpad,
                                      bytes_accessed=bytes_accessed),
    )(h_G, w_cat, b_cat)
    return out[:, :d_an], out[:, d_an:d_an + d_ae]


# ---------------------------------------------------------------------------
# Kernel 2: AggregationBlock with fused fc||gate matmul
#   y      = x @ [fc_w || gate_w] + [fc_b || gate_b]        (N, 2*dh)
#   y_sw   = roll(y, dh)     -> gate lanes under fc lanes   (XLU half-rotation)
#   gated  = y * sigmoid(y_sw)                               (lanes [0, dh) valid)
#   out    = sum_n gated     (keepdim)                       lane-dense store
# Wrapper slices out[:, :dh]  ==  sum_n fc(x_n) * sigmoid(gate(x_n)).
# ---------------------------------------------------------------------------
def aggregation_kernel(x_ref, w_ref, b_ref, o_ref, *, dh):
    y = jnp.dot(x_ref[...], w_ref[...],
                preferred_element_type=jnp.float32) + b_ref[...]
    y_sw = pltpu.roll(y, shift=dh, axis=1)        # half-rotation of 2*dh lanes
    gated = y * jax.nn.sigmoid(y_sw)              # lanes [0, dh): fc*sigmoid(gate)
    # TODO(synk): for large node counts, tile the node axis with an 'arbitrary'
    # reduction grid axis + f32 VMEM accumulator (and route the sum through a
    # ones-row matmul) instead of one whole-array block / XLU sublane reduce.
    o_ref[...] = jnp.sum(gated, axis=0, keepdims=True).astype(o_ref.dtype)


def aggregation_block(x, w_cat, b_cat, dh):
    N, H = x.shape
    Wout = w_cat.shape[1]                          # 2*dh (== 128 for H=32)
    kernel = functools.partial(aggregation_kernel, dh=dh)
    flops = 2 * N * H * Wout + 4 * N * Wout
    bytes_accessed = 4 * (N * H + H * Wout + Wout + Wout)
    out = pl.pallas_call(
        kernel,
        out_shape=jax.ShapeDtypeStruct((1, Wout), jnp.float32),
        grid=(1,),
        in_specs=[_full((N, H)), _full((H, Wout)), _full((1, Wout))],
        out_specs=_full((1, Wout)),
        compiler_params=pltpu.CompilerParams(
            dimension_semantics=("arbitrary",)),
        cost_estimate=pl.CostEstimate(flops=flops,
                                      transcendentals=N * Wout,
                                      bytes_accessed=bytes_accessed),
    )(x, w_cat, b_cat)
    return out[:, :dh]


# ---------------------------------------------------------------------------
# Parameters (deterministic synthetic init matching the __init__ shapes)
# ---------------------------------------------------------------------------
def init_params(key, hidden_dim, num_node_type, num_edge_type):
    ks = jax.random.split(key, 8)

    def linear(k, din, dout):
        kw, kb = jax.random.split(k)
        bound = 1.0 / float(din) ** 0.5
        w = jax.random.uniform(kw, (din, dout), jnp.float32, -bound, bound)
        b = jax.random.uniform(kb, (dout,), jnp.float32, -bound, bound)
        return w, b

    embed_node = jax.random.normal(ks[0], (num_node_type, hidden_dim), jnp.float32)
    embed_node = embed_node.at[0].set(0.0)  # padding_idx=0
    addnode_out = num_node_type + 1 if num_node_type != 1 else num_node_type
    return dict(
        embed_node=embed_node,
        addnode=linear(ks[1], num_node_type, addnode_out),
        addedge=linear(ks[2], num_node_type, num_node_type),
        agg_fc=linear(ks[3], hidden_dim, 2 * hidden_dim),
        agg_gate=linear(ks[4], hidden_dim, 2 * hidden_dim),
    )


def fuse_params(params):
    """Precompute concatenated + lane-padded weights once (outside the hot path)."""
    an_w, an_b = params['addnode']
    ae_w, ae_b = params['addedge']
    din = an_w.shape[0]
    d_an, d_ae = an_w.shape[1], ae_w.shape[1]
    d_used = d_an + d_ae
    dpad = max(LANE, _round_up(d_used, LANE))
    logits_w = jnp.zeros((din, dpad), jnp.float32)
    logits_w = logits_w.at[:, :d_an].set(an_w).at[:, d_an:d_used].set(ae_w)
    logits_b = jnp.zeros((1, dpad), jnp.float32)
    logits_b = logits_b.at[0, :d_an].set(an_b).at[0, d_an:d_used].set(ae_b)

    fc_w, fc_b = params['agg_fc']
    g_w, g_b = params['agg_gate']
    agg_w = jnp.concatenate([fc_w, g_w], axis=1)           # (H, 4H)
    agg_b = jnp.concatenate([fc_b, g_b])[None, :]          # (1, 4H)
    return dict(embed_node=params['embed_node'],
                logits_w=logits_w, logits_b=logits_b,
                d_an=d_an, d_ae=d_ae,
                agg_w=agg_w, agg_b=agg_b, dh=fc_w.shape[1])


# ---------------------------------------------------------------------------
# SGGM forward (sampling glue in JAX, compute in Pallas)
# ---------------------------------------------------------------------------
def sggm_forward(fp, cfg, key):
    B, H, NT = cfg['batchsize'], cfg['hidden_dim'], cfg['num_node_type']
    k_node, k_edge = jax.random.split(key)

    # In the reference forward both heads only ever see h_G = zeros(B, NT),
    # so addnode + addedge logits are produced by ONE fused pallas_call.
    h_G0 = jnp.zeros((B, NT), jnp.float32)
    logp_an, logp_ae = fused_addnode_addedge_logits(
        h_G0, fp['logits_w'], fp['logits_b'], fp['d_an'], fp['d_ae'])

    # samples = f_addnode(); vertices = cat(empty, samples), shape (B, 1)
    samples = jax.random.categorical(k_node, logp_an, axis=-1)
    vertices = samples.reshape(B, 1).astype(jnp.int32)

    # h_v = embed_node_layer(vertices) -> (B, 1, H); seq len 1 so flatten to (B, H)
    # TODO(synk): addnode produces NT+1 classes but the embedding has NT rows
    # (the PyTorch reference would raise); we clamp out-of-range indices.
    h_v = jnp.take(fp['embed_node'], vertices[:, 0], axis=0, mode='clip')

    # h_G = initilize_h_block(h_v): fused fc||gate matmul + gated sum over nodes
    h_G = aggregation_block(h_v, fp['agg_w'], fp['agg_b'], fp['dh'])  # (1, 2H)
    h_G = h_G.reshape(1, 1, 2 * H)                                    # torch (1,1,2H)

    # TODO(synk): the reference forward then calls f_addedge(h_G) whose Linear
    # expects num_node_type inputs (dim mismatch with 2H) inside a loop over an
    # undefined add_edge_flag; we exercise the well-defined h_G=None path whose
    # logits were already produced by the fused call above.
    edges = jax.random.bernoulli(k_edge, jax.nn.sigmoid(logp_ae)).astype(jnp.float32)

    return dict(vertices=vertices, h_G=h_G, edges=edges,
                addnode_logp=logp_an, addedge_logp=logp_ae)


if __name__ == "__main__":
    cfg = dict(batchsize=2, hidden_dim=32, num_node_type=4,
               num_edge_type=3, max_num_node=15)
    key = jax.random.PRNGKey(0)
    pkey, fkey = jax.random.split(key)
    params = init_params(pkey, cfg['hidden_dim'], cfg['num_node_type'],
                         cfg['num_edge_type'])
    fused = fuse_params(params)
    out = sggm_forward(fused, cfg, fkey)
    jax.tree_util.tree_map(jax.block_until_ready, out)
    print("KERNEL_OK")
</pallas_src>

<mosaic_0001>
module attributes {stable_mosaic.version = 11 : i64} {
  func.func @fused_logits_kernel(%arg0: i32, %arg1: memref<2x4xf32, #tpu.memory_space<vmem>>, %arg2: memref<4x128xf32, #tpu.memory_space<vmem>>, %arg3: memref<1x128xf32, #tpu.memory_space<vmem>>, %arg4: memref<2x128xf32, #tpu.memory_space<vmem>>) attributes {dimension_semantics = [#tpu.dimension_semantics<arbitrary>], iteration_bounds = array<i64: 1>, scalar_prefetch = 0 : i64, scratch_operands = 0 : i64, tpu.core_type = #tpu.core_type<tc>, window_params = [{pipeline_mode = #tpu.pipeline_mode<synchronous>, transform_indices = @transform_0, window_bounds = array<i64: 2, 4>}, {pipeline_mode = #tpu.pipeline_mode<synchronous>, transform_indices = @transform_1, window_bounds = array<i64: 4, 128>}, {pipeline_mode = #tpu.pipeline_mode<synchronous>, transform_indices = @transform_2, window_bounds = array<i64: 1, 128>}, {pipeline_mode = #tpu.pipeline_mode<synchronous>, transform_indices = @transform_3, window_bounds = array<i64: 2, 128>}]} {
    %c0 = arith.constant 0 : index
    %c0_0 = arith.constant 0 : index
    %0 = vector.load %arg1[%c0, %c0_0] : memref<2x4xf32, #tpu.memory_space<vmem>>, vector<2x4xf32>
    %c0_1 = arith.constant 0 : index
    %c0_2 = arith.constant 0 : index
    %1 = vector.load %arg2[%c0_1, %c0_2] : memref<4x128xf32, #tpu.memory_space<vmem>>, vector<4x128xf32>
    %cst = arith.constant dense<0.000000e+00> : vector<2x128xf32>
    %2 = tpu.matmul %0, %1, %cst {dimension_numbers = #tpu.dot_dimension_numbers<[1], [0], [0], [1], [0, 0, 1, 1], [], []>} : vector<2x4xf32>, vector<4x128xf32>, vector<2x128xf32> -> vector<2x128xf32>
    %c0_3 = arith.constant 0 : index
    %c0_4 = arith.constant 0 : index
    %3 = vector.load %arg3[%c0_3, %c0_4] : memref<1x128xf32, #tpu.memory_space<vmem>>, vector<1x128xf32>
    %4 = vector.broadcast %3 : vector<1x128xf32> to vector<2x128xf32>
    %5 = arith.addf %2, %4 : vector<2x128xf32>
    %6 = tpu.iota {dimensions = array<i32: 1>} : vector<2x128xi32>
    %c0_i32 = arith.constant 0 : i32
    %7 = vector.broadcast %c0_i32 : i32 to vector<2x128xi32>
    %8 = arith.cmpi sge, %6, %7 : vector<2x128xi32>
    %c5_i32 = arith.constant 5 : i32
    %9 = vector.broadcast %c5_i32 : i32 to vector<2x128xi32>
    %10 = arith.cmpi slt, %6, %9 : vector<2x128xi32>
    %11 = arith.andi %8, %10 : vector<2x128xi1>
    %cst_5 = arith.constant -1.000000e+30 : f32
    %12 = vector.broadcast %cst_5 : f32 to vector<2x128xf32>
    %13 = arith.select %11, %5, %12 : vector<2x128xi1>, vector<2x128xf32>
    %cst_6 = arith.constant dense<0xFF800000> : vector<2xf32>
    %14 = vector.multi_reduction <maximumf>, %13, %cst_6 [1] : vector<2x128xf32> to vector<2xf32>
    %15 = vector.shape_cast %14 : vector<2xf32> to vector<2x1xf32>
    %16 = vector.broadcast %15 : vector<2x1xf32> to vector<2x128xf32>
    %17 = arith.subf %13, %16 : vector<2x128xf32>
    %18 = math.exp %17 : vector<2x128xf32>
    %cst_7 = arith.constant 0.000000e+00 : f32
    %19 = vector.broadcast %cst_7 : f32 to vector<2x128xf32>
    %20 = arith.select %11, %18, %19 : vector<2x128xi1>, vector<2x128xf32>
    %cst_8 = arith.constant dense<0.000000e+00> : vector<2xf32>
    %21 = vector.multi_reduction <add>, %20, %cst_8 [1] : vector<2x128xf32> to vector<2xf32>
    %22 = vector.shape_cast %21 : vector<2xf32> to vector<2x1xf32>
    %23 = math.log %22 : vector<2x1xf32>
    %24 = vector.broadcast %23 : vector<2x1xf32> to vector<2x128xf32>
    %25 = arith.subf %17, %24 : vector<2x128xf32>
    %c5_i32_9 = arith.constant 5 : i32
    %26 = vector.broadcast %c5_i32_9 : i32 to vector<2x128xi32>
    %27 = arith.cmpi sge, %6, %26 : vector<2x128xi32>
    %c9_i32 = arith.constant 9 : i32
    %28 = vector.broadcast %c9_i32 : i32 to vector<2x128xi32>
    %29 = arith.cmpi slt, %6, %28 : vector<2x128xi32>
    %30 = arith.andi %27, %29 : vector<2x128xi1>
    %cst_10 = arith.constant -1.000000e+30 : f32
    %31 = vector.broadcast %cst_10 : f32 to vector<2x128xf32>
    %32 = arith.select %30, %5, %31 : vector<2x128xi1>, vector<2x128xf32>
    %cst_11 = arith.constant dense<0xFF800000> : vector<2xf32>
    %33 = vector.multi_reduction <maximumf>, %32, %cst_11 [1] : vector<2x128xf32> to vector<2xf32>
    %34 = vector.shape_cast %33 : vector<2xf32> to vector<2x1xf32>
    %35 = vector.broadcast %34 : vector<2x1xf32> to vector<2x128xf32>
    %36 = arith.subf %32, %35 : vector<2x128xf32>
    %37 = math.exp %36 : vector<2x128xf32>
    %cst_12 = arith.constant 0.000000e+00 : f32
    %38 = vector.broadcast %cst_12 : f32 to vector<2x128xf32>
    %39 = arith.select %30, %37, %38 : vector<2x128xi1>, vector<2x128xf32>
    %cst_13 = arith.constant dense<0.000000e+00> : vector<2xf32>
    %40 = vector.multi_reduction <add>, %39, %cst_13 [1] : vector<2x128xf32> to vector<2xf32>
    %41 = vector.shape_cast %40 : vector<2xf32> to vector<2x1xf32>
    %42 = math.log %41 : vector<2x1xf32>
    %43 = vector.broadcast %42 : vector<2x1xf32> to vector<2x128xf32>
    %44 = arith.subf %36, %43 : vector<2x128xf32>
    %cst_14 = arith.constant 0.000000e+00 : f32
    %45 = vector.broadcast %cst_14 : f32 to vector<2x128xf32>
    %46 = arith.select %30, %44, %45 : vector<2x128xi1>, vector<2x128xf32>
    %47 = arith.select %11, %25, %46 : vector<2x128xi1>, vector<2x128xf32>
    %c0_15 = arith.constant 0 : index
    %c0_16 = arith.constant 0 : index
    %48 = vector.load %arg4[%c0_15, %c0_16] : memref<2x128xf32, #tpu.memory_space<vmem>>, vector<2x128xf32>
    tpu.vector_store %arg4[%c0_15, %c0_16], %47 {strides = array<i32>} : memref<2x128xf32, #tpu.memory_space<vmem>>, vector<2x128xf32>,
    return
  }
  func.func @transform_0(%arg0: i32) -> (i32, i32) {
    %c0_i32 = arith.constant 0 : i32
    %c0_i32_0 = arith.constant 0 : i32
    %c0_i32_1 = arith.constant 0 : i32
    return %c0_i32, %c0_i32_0 : i32, i32
  }
  func.func @transform_1(%arg0: i32) -> (i32, i32) {
    %c0_i32 = arith.constant 0 : i32
    %c0_i32_0 = arith.constant 0 : i32
    %c0_i32_1 = arith.constant 0 : i32
    return %c0_i32, %c0_i32_0 : i32, i32
  }
  func.func @transform_2(%arg0: i32) -> (i32, i32) {
    %c0_i32 = arith.constant 0 : i32
    %c0_i32_0 = arith.constant 0 : i32
    %c0_i32_1 = arith.constant 0 : i32
    return %c0_i32, %c0_i32_0 : i32, i32
  }
  func.func @transform_3(%arg0: i32) -> (i32, i32) {
    %c0_i32 = arith.constant 0 : i32
    %c0_i32_0 = arith.constant 0 : i32
    %c0_i32_1 = arith.constant 0 : i32
    return %c0_i32, %c0_i32_0 : i32, i32
  }
}

</mosaic_0001>

<llo_original>
// kernel: tpu_custom_call.1
$region0: #{tpu_custom_call.1}
  #allocation0 [shape = 'u32[]', space=smem, size = 0x4, offset = 0x4, fixed_abs, tag = 'smem constant byte address 0x4 - core index']
  #allocation1 [shape = 'u32[72,128]{1,0:T(1,128)}', space=vmem, size = 0x9000, scoped, tag = 'internal scratch']
  %s0 = inlined_call_operand.hbm [shape: f32[2,4], index: 0, kind: input, shape index: {}]
  %s1 = inlined_call_operand.hbm [shape: f32[4,128], index: 1, kind: input, shape index: {}]
  %s2 = inlined_call_operand.vmem [shape: f32[1,128], index: 2, kind: input, shape index: {}]
  %s3 = inlined_call_operand.hbm [shape: f32[2,128], index: 3, kind: output, shape index: {}]
  %s4 = sld [smem:[#allocation0]]
  $region30: #{tpu_custom_call.1} parent=0
    _
  %s6 = ssub.s32 1, %s4
  %s7 = scalar_select 0, %s6, %s4
  $region1: #{tpu_custom_call.1} parent=0
    #allocation2 [shape = 'u8[1024]{0}', space=vmem, size = 0x400, scoped, tag = 'input window, operand 0, single buffered']
    #allocation3 [shape = 's32[1]{0}', space=sflag, size = 0x4, scoped, tag = 'scoped memory for tpu_custom_call.1']
    #allocation4 [shape = 's32[1]{0}', space=sflag, size = 0x4, scoped, tag = 'scoped memory for tpu_custom_call.1']
    #allocation5 [shape = 'u8[2048]{0}', space=vmem, size = 0x800, scoped, tag = 'input window, operand 1, single buffered']
    #allocation6 [shape = 's32[1]{0}', space=sflag, size = 0x4, scoped, tag = 'scoped memory for tpu_custom_call.1']
    #allocation7 [shape = 'u8[1024]{0}', space=vmem, size = 0x400, scoped, tag = 'output window, operand 0, single buffered']
    %8 = vsyncpa [#allocation3], 0
    %9 = vsyncpa [#allocation6], 0
    %10 = vsyncpa [#allocation4], 0
    // Predicated region
    $region2: #{tpu_custom_call.1} parent=1 // pred_check
      _
    $region3: #{tpu_custom_call.1} parent=1 // pred_check_branch
      %12 = sbr.rel (0) target = $region5
    $region4: #{tpu_custom_call.1} parent=1 // pred_region
      %14 = vsyncadd [#allocation3], 0
      %s16 = sshll.u32 %s0, 4
      %s17 = int_to_ptr.hbm [resolvable:$true] %s16
      %s18 = sshll.u32 [#allocation2], 4
      %s19 = int_to_ptr.vmem [resolvable:$true] %s18
      %21 = dma.hbm_to_vmem [thread:$0]  %s17, 32, %s19, [#allocation3]
    $region5: #{tpu_custom_call.1} parent=1 // pred_fallthru
      _
    // Predicated region
    $region6: #{tpu_custom_call.1} parent=1 // pred_check
      _
    $region7: #{tpu_custom_call.1} parent=1 // pred_check_branch
      %23 = sbr.rel (0) target = $region9
    $region8: #{tpu_custom_call.1} parent=1 // pred_region
      %25 = vsyncadd [#allocation6], 0
      %s27 = sshll.u32 %s1, 4
      %s28 = int_to_ptr.hbm [resolvable:$true] %s27
      %s29 = sshll.u32 [#allocation5], 4
      %s30 = int_to_ptr.vmem [resolvable:$true] %s29
      %32 = dma.hbm_to_vmem [thread:$0]  %s28, 64, %s30, [#allocation6]
    $region9: #{tpu_custom_call.1} parent=1 // pred_fallthru
      _
    // Predicated region
    $region10: #{tpu_custom_call.1} parent=1 // pred_check
      _
    $region11: #{tpu_custom_call.1} parent=1 // pred_check_branch
      %34 = sbr.rel (0) target = $region13
    $region12: #{tpu_custom_call.1} parent=1 // pred_region
      _
    $region13: #{tpu_custom_call.1} parent=1 // pred_fallthru
      _
    // Predicated region
    $region14: #{tpu_custom_call.1} parent=1 // pred_check
      _
    $region15: #{tpu_custom_call.1} parent=1 // pred_check_branch
      %36 = sbr.rel (0) target = $region17
    $region16: #{tpu_custom_call.1} parent=1 // pred_region
      %38 = dma.done [#allocation3], 32
    $region17: #{tpu_custom_call.1} parent=1 // pred_fallthru
      _
    // Predicated region
    $region18: #{tpu_custom_call.1} parent=1 // pred_check
      _
    $region19: #{tpu_custom_call.1} parent=1 // pred_check_branch
      %40 = sbr.rel (0) target = $region21
    $region20: #{tpu_custom_call.1} parent=1 // pred_region
      %42 = dma.done [#allocation6], 64
    $region21: #{tpu_custom_call.1} parent=1 // pred_fallthru
      _
    %v43 = vld [vmem:[#allocation2] sm:$0x3]
    %v44 = vld [vmem:[#allocation5] sm:$0xf]
    %v45 = vld [vmem:[%s2] sm:$0x1]
    %v47 = vperm.slane %v45, 0
    %vm49 = vcmask 31744
    %v51 = vsel %vm49, %v43, 0
    %vm53 = vcmask 1043456
    %v55 = vsel %vm53, %v44, 0
    %57 = vmatpush.msra.mxu0 0.0
    %58 = vmatpush.msra.mxu0 0.0
    %59 = vmatpush.msra.mxu0 0.0
    %60 = vmatpush.msra.mxu0 0.0
    %61 = vmatpush.msra.mxu0 0.0
    %62 = vmatpush.msra.mxu0 0.0
    %63 = vmatpush.msra.mxu0 0.0
    %64 = vmatpush.msra.mxu0 0.0
    %65 = vmatpush.msra.mxu0 0.0
    %66 = vmatpush.msra.mxu0 0.0
    %67 = vmatpush.msra.mxu0 0.0
    %68 = vmatpush.msra.mxu0 0.0
    %69 = vmatpush.msra.mxu0 0.0
    %70 = vmatpush.msra.mxu0 0.0
    %71 = vmatpush.msra.mxu0 0.0
    %72 = vmatpush.msra.mxu0 %v55
    %73 = vmatmul.f32.gmra.mxu0 %v51
    %v74 = vpop.f32.mrf.mxu0
    %v75 = vadd.f32 %v47, %v74
    %76 = vdwg.mxu0
    %v77 = vlaneseq
    %v78 = vand.u32 %v77, 127
    %vm79 = vcmp.ge.s32.totalorder %v78, 0
    %vm80 = vcmp.lt.s32.totalorder %v78, 5
    %vm81 = vmand %vm79, %vm80
    %v82 = vsel %vm81, %v75, -1e+30
    %vm83 = vcmask 1041408
    %v84 = vsel %vm83, %v82, -inf
    %85 = vmax.xlane.f32.xlu0 %v84
    %v86 = vpop.xlane.xlu0 %85
    %v87 = vsub.f32 %v82, %v86
    %v88 = vmul.f32 %v87, 1.442695
    %v89 = vpow.pop %v88
    %v90 = vsel %vm81, %v89, 0.0
    %v91 = vsel %vm83, %v90, 0.0
    %92 = vadd.xlane.f32.xlu0 %v91
    %v93 = vpop.xlane.xlu0 %92
    %v94 = vlog2.pop %v93
    %v95 = vmul.f32 %v94, 0.6931472
    %v96 = vsub.f32 %v87, %v95
    %vm97 = vcmp.ge.s32.totalorder %v78, 5
    %vm98 = vcmp.lt.s32.totalorder %v78, 9
    %vm99 = vmand %vm97, %vm98
    %v100 = vsel %vm99, %v75, -1e+30
    %v101 = vsel %vm83, %v100, -inf
    %102 = vmax.xlane.f32.xlu0 %v101
    %v103 = vpop.xlane.xlu0 %102
    %v104 = vsub.f32 %v100, %v103
    %v105 = vmul.f32 %v104, 1.442695
    %v106 = vpow.pop %v105
    %v107 = vsel %vm99, %v106, 0.0
    %v108 = vsel %vm83, %v107, 0.0
    %109 = vadd.xlane.f32.xlu0 %v108
    %v110 = vpop.xlane.xlu0 %109
    %v111 = vlog2.pop %v110
    %v112 = vmul.f32 %v111, 0.6931472
    %v113 = vsub.f32 %v104, %v112
    %v114 = vsel %vm99, %v113, 0.0
    %v115 = vsel %vm81, %v96, %v114
    %116 = vst [vmem:[#allocation7] sm:$0x3] %v115
    // Predicated region
    $region22: #{tpu_custom_call.1} parent=1 // pred_check
      _
    $region23: #{tpu_custom_call.1} parent=1 // pred_check_branch
      %118 = sbr.rel (0) target = $region25
    $region24: #{tpu_custom_call.1} parent=1 // pred_region
      %120 = vsyncadd [#allocation4], 0
      %s122 = sshll.u32 [#allocation7], 4
      %s123 = int_to_ptr.vmem [resolvable:$true] %s122
      %s124 = sshll.u32 %s3, 4
      %s125 = int_to_ptr.hbm [resolvable:$true] %s124
      %127 = dma.vmem_to_hbm [thread:$0]  %s123, 32, %s125, [#allocation4]
    $region25: #{tpu_custom_call.1} parent=1 // pred_fallthru
      _
    // Predicated region
    $region26: #{tpu_custom_call.1} parent=1 // pred_check
      _
    $region27: #{tpu_custom_call.1} parent=1 // pred_check_branch
      %129 = sbr.rel (0) target = $region29
    $region28: #{tpu_custom_call.1} parent=1 // pred_region
      %131 = dma.done [#allocation4], 32
    $region29: #{tpu_custom_call.1} parent=1 // pred_fallthru
      _
    %132 = vsyncpa [#allocation3], 1
    %133 = vsyncpa [#allocation6], 1
    %134 = vsyncpa [#allocation4], 1

</llo_original>
